<compile_context>
chip_gen: v5e
topology: v5e:2x2
jax: 0.10.0
libtpu: 0.0.40
codegen_flags: <defaults>
</compile_context>

<pallas_src>
import functools

import numpy as np

import jax
import jax.numpy as jnp
from jax.experimental import pallas as pl
from jax.experimental.pallas import tpu as pltpu


# --------------------------------------------------------------------------- #
# Kernel
# --------------------------------------------------------------------------- #
def bow_kernel(x_ref, w1_ref, b1_ref, w2_ref, b2_ref, wc_ref, bc_ref, out_ref):
    # x arrives as f32 and is cast to bf16 in VMEM (no extra HBM cast pass).
    x = x_ref[...].astype(jnp.bfloat16)                              # (bm, V_in)

    # hidden1 + ReLU  (MXU bf16 inputs, f32 accumulation / bias / activation)
    h1 = jnp.dot(x, w1_ref[...], preferred_element_type=jnp.float32) + b1_ref[...]
    h1 = jnp.maximum(h1, 0.0)                                        # (bm, H1) f32

    # hidden2 + ReLU
    h2 = jnp.dot(h1.astype(jnp.bfloat16), w2_ref[...],
                 preferred_element_type=jnp.float32) + b2_ref[...]
    h2 = jnp.maximum(h2, 0.0)                                        # (bm, H2) f32

    # residual-style add (requires H1 == H2); dropout = identity at eval time.
    h = (h1 + h2).astype(jnp.bfloat16)

    # classifier
    out = jnp.dot(h, wc_ref[...], preferred_element_type=jnp.float32) + bc_ref[...]
    out_ref[...] = out.astype(out_ref.dtype)                         # (bm, V_out)


# --------------------------------------------------------------------------- #
# Spec / sizing helpers
# --------------------------------------------------------------------------- #
def _resident_spec(shape, single_buffer):
    """Weights/biases: same (0, 0) block every grid step -> VMEM-resident.
    With a constant index_map there is nothing to pipeline, so request a single
    buffer (halves resident VMEM); fall back silently if unsupported."""
    index_map = lambda i: (0, 0)
    if single_buffer:
        try:
            return pl.BlockSpec(shape, index_map, pipeline_mode=pl.Buffered(1))
        except Exception:
            pass
    return pl.BlockSpec(shape, index_map)


def _pick_vmem_limit(bm, v_in, h1, h2, v_out, n_weight_buffers):
    """VMEM limit derived from actual buffer sizes, capped by chip capacity."""
    bytes_needed = (
        2 * bm * v_in * 4                                            # x tiles (f32, 2 bufs)
        + 2 * bm * v_out * 4                                         # out tiles (2 bufs)
        + n_weight_buffers * 2 * (v_in * h1 + h1 * h2 + h2 * v_out)  # bf16 weights
        + n_weight_buffers * 4 * (h1 + h2 + v_out)                   # f32 biases
        + 4 * bm * (h1 + h2 + v_out)                                 # f32 intermediates
    )
    try:
        vmem_cap = int(pltpu.get_tpu_info().vmem_capacity_bytes)
    except Exception:
        vmem_cap = 64 << 20          # worst-case per-TC VMEM (v7x) if query fails
    cap = (vmem_cap * 3) // 4        # headroom for Mosaic internal scratch
    return int(min(max(2 * bytes_needed, 32 << 20), cap))


# --------------------------------------------------------------------------- #
# Forward
# --------------------------------------------------------------------------- #
@functools.partial(
    jax.jit, static_argnames=("bm", "single_buffer_residents", "out_dtype"))
def _bow_forward(x, w1, b1, w2, b2, wc, bc, *, bm, single_buffer_residents,
                 out_dtype):
    B, v_in = x.shape
    h1 = w1.shape[1]
    h2 = w2.shape[1]
    v_out = wc.shape[1]
    if h1 != h2:
        raise ValueError(
            "output1 + output2 in BagOfWords.forward requires "
            f"hidden_units1 == hidden_units2 (got {h1} vs {h2}).")

    n_tiles = pl.cdiv(B, bm)          # ragged last batch tile is masked by Pallas
    n_weight_buffers = 1 if single_buffer_residents else 2

    cost = pl.CostEstimate(
        flops=2 * B * (v_in * h1 + h1 * h2 + h2 * v_out),
        transcendentals=0,
        bytes_accessed=(
            B * v_in * 4                                             # x (f32)
            + (v_in * h1 + h1 * h2 + h2 * v_out) * 2                 # weights (bf16)
            + (h1 + h2 + v_out) * 4                                  # biases (f32)
            + B * v_out * np.dtype(out_dtype).itemsize               # out
        ),
    )

    return pl.pallas_call(
        bow_kernel,
        out_shape=jax.ShapeDtypeStruct((B, v_out), out_dtype),
        grid=(n_tiles,),
        in_specs=[
            pl.BlockSpec((bm, v_in), lambda i: (i, 0)),              # batch-tiled x (f32)
            _resident_spec(w1.shape, single_buffer_residents),
            _resident_spec(b1.shape, single_buffer_residents),
            _resident_spec(w2.shape, single_buffer_residents),
            _resident_spec(b2.shape, single_buffer_residents),
            _resident_spec(wc.shape, single_buffer_residents),
            _resident_spec(bc.shape, single_buffer_residents),
        ],
        out_specs=pl.BlockSpec((bm, v_out), lambda i: (i, 0)),
        compiler_params=pltpu.CompilerParams(
            dimension_semantics=("parallel",),   # v7x: 2 TCs split batch tiles
            vmem_limit_bytes=_pick_vmem_limit(bm, v_in, h1, h2, v_out,
                                              n_weight_buffers),
        ),
        cost_estimate=cost,
    )(x, w1, b1, w2, b2, wc, bc)


def prepare_params(w1, b1, w2, b2, wc, bc):
    """One-time parameter prep (hoisted out of the per-call path):
    weight matrices -> bf16 (MXU-native); biases kept f32 as (1, out) rows.
    Weights are expected as (in_features, out_features), i.e. torch weight.T."""
    return (w1.astype(jnp.bfloat16), b1.astype(jnp.float32).reshape(1, -1),
            w2.astype(jnp.bfloat16), b2.astype(jnp.float32).reshape(1, -1),
            wc.astype(jnp.bfloat16), bc.astype(jnp.float32).reshape(1, -1))


def bag_of_words_forward(x, params, *, bm=None, out_dtype=jnp.float32):
    """Eval-mode BagOfWords forward.  x: (B, V_in) f32; params from prepare_params."""
    B = x.shape[0]
    if bm is None:
        # Small batches: one full-batch tile (no padded rows / wasted MXU work).
        # Large batches: 512-row tiles to amortize per-grid-step overhead while
        # x/out tiles stay small next to the VMEM-resident weights.
        bm = B if B <= 512 else 512
    try:
        return _bow_forward(x, *params, bm=bm, single_buffer_residents=True,
                            out_dtype=out_dtype)
    except Exception:
        # pl.Buffered(1) resident blocks unsupported on this jax/libtpu combo:
        # retry with default double-buffered resident weights.
        return _bow_forward(x, *params, bm=bm, single_buffer_residents=False,
                            out_dtype=out_dtype)


# --------------------------------------------------------------------------- #
# Demo / self-test
# --------------------------------------------------------------------------- #
def init_linear(key, in_features, out_features):
    """Deterministic init mimicking torch.nn.Linear (uniform +/- 1/sqrt(in)).
    Weight returned transposed to (in, out); bias as (1, out)."""
    kw, kb = jax.random.split(key)
    bound = 1.0 / jnp.sqrt(jnp.float32(in_features))
    w = jax.random.uniform(kw, (in_features, out_features), jnp.float32, -bound, bound)
    b = jax.random.uniform(kb, (1, out_features), jnp.float32, -bound, bound)
    return w, b


if __name__ == "__main__":
    # Small shapes consistent with the module:
    #   input_vocab_size=256, hidden_units1=hidden_units2=128, output_vocab_size=128.
    # (Note for v6e/v7x: hidden/output dims that are multiples of 256 would fill
    #  the 256-wide MXU; 128 half-fills it. Kept at 128 to match the module demo.)
    B, V_IN, H1, H2, V_OUT = 8, 256, 128, 128, 128

    key = jax.random.PRNGKey(0)
    kx, k1, k2, kc = jax.random.split(key, 4)

    x = jax.random.normal(kx, (B, V_IN), jnp.float32)
    w1, b1 = init_linear(k1, V_IN, H1)
    w2, b2 = init_linear(k2, H1, H2)
    wc, bc = init_linear(kc, H2, V_OUT)

    params = prepare_params(w1, b1, w2, b2, wc, bc)   # bf16 weight cast, once

    out = bag_of_words_forward(x, params)
    out = jax.block_until_ready(out)

    # Pure-JAX reference with the same bf16-input / f32-accumulation math.
    xb = x.astype(jnp.bfloat16)
    h1_r = jnp.maximum(
        jnp.dot(xb, params[0], preferred_element_type=jnp.float32) + b1, 0.0)
    h2_r = jnp.maximum(
        jnp.dot(h1_r.astype(jnp.bfloat16), params[2],
                preferred_element_type=jnp.float32) + b2, 0.0)
    ref = jnp.dot((h1_r + h2_r).astype(jnp.bfloat16), params[4],
                  preferred_element_type=jnp.float32) + bc

    assert out.shape == (B, V_OUT)
    assert jnp.allclose(out, ref, atol=1e-2, rtol=1e-2), "mismatch vs. bf16 JAX reference"

    # Loose sanity check against the full-f32 math as well.
    h1_f = jnp.maximum(x @ w1 + b1, 0.0)
    h2_f = jnp.maximum(h1_f @ w2 + b2, 0.0)
    ref_f32 = (h1_f + h2_f) @ wc + bc
    assert jnp.allclose(out, ref_f32, atol=5e-2, rtol=5e-2), "mismatch vs. f32 reference"

    print("KERNEL_OK")
</pallas_src>

<mosaic_0001>
module attributes {stable_mosaic.version = 11 : i64} {
  func.func @bow_kernel(%arg0: i32, %arg1: memref<8x256xf32, #tpu.memory_space<vmem>>, %arg2: memref<256x128xbf16, #tpu.memory_space<vmem>>, %arg3: memref<1x128xf32, #tpu.memory_space<vmem>>, %arg4: memref<128x128xbf16, #tpu.memory_space<vmem>>, %arg5: memref<1x128xf32, #tpu.memory_space<vmem>>, %arg6: memref<128x128xbf16, #tpu.memory_space<vmem>>, %arg7: memref<1x128xf32, #tpu.memory_space<vmem>>, %arg8: memref<8x128xf32, #tpu.memory_space<vmem>>) attributes {dimension_semantics = [#tpu.dimension_semantics<parallel>], iteration_bounds = array<i64: 1>, scalar_prefetch = 0 : i64, scratch_operands = 0 : i64, tpu.core_type = #tpu.core_type<tc>, window_params = [{transform_indices = @transform_0, window_bounds = array<i64: 8, 256>}, {pipeline_mode = #tpu.pipeline_mode<synchronous>, transform_indices = @transform_1, window_bounds = array<i64: 256, 128>}, {pipeline_mode = #tpu.pipeline_mode<synchronous>, transform_indices = @transform_2, window_bounds = array<i64: 1, 128>}, {pipeline_mode = #tpu.pipeline_mode<synchronous>, transform_indices = @transform_3, window_bounds = array<i64: 128, 128>}, {pipeline_mode = #tpu.pipeline_mode<synchronous>, transform_indices = @transform_4, window_bounds = array<i64: 1, 128>}, {pipeline_mode = #tpu.pipeline_mode<synchronous>, transform_indices = @transform_5, window_bounds = array<i64: 128, 128>}, {pipeline_mode = #tpu.pipeline_mode<synchronous>, transform_indices = @transform_6, window_bounds = array<i64: 1, 128>}, {transform_indices = @transform_7, window_bounds = array<i64: 8, 128>}]} {
    %c0 = arith.constant 0 : index
    %c0_0 = arith.constant 0 : index
    %0 = vector.load %arg1[%c0, %c0_0] : memref<8x256xf32, #tpu.memory_space<vmem>>, vector<8x256xf32>
    %1 = arith.truncf %0 : vector<8x256xf32> to vector<8x256xbf16>
    %c0_1 = arith.constant 0 : index
    %c0_2 = arith.constant 0 : index
    %2 = vector.load %arg2[%c0_1, %c0_2] : memref<256x128xbf16, #tpu.memory_space<vmem>>, vector<256x128xbf16>
    %cst = arith.constant dense<0.000000e+00> : vector<8x128xf32>
    %3 = tpu.matmul %1, %2, %cst {dimension_numbers = #tpu.dot_dimension_numbers<[1], [0], [0], [1], [0, 0, 1, 1], [], []>} : vector<8x256xbf16>, vector<256x128xbf16>, vector<8x128xf32> -> vector<8x128xf32>
    %c0_3 = arith.constant 0 : index
    %c0_4 = arith.constant 0 : index
    %4 = vector.load %arg3[%c0_3, %c0_4] : memref<1x128xf32, #tpu.memory_space<vmem>>, vector<1x128xf32>
    %5 = vector.broadcast %4 : vector<1x128xf32> to vector<8x128xf32>
    %6 = arith.addf %3, %5 : vector<8x128xf32>
    %cst_5 = arith.constant 0.000000e+00 : f32
    %7 = vector.broadcast %cst_5 : f32 to vector<8x128xf32>
    %8 = arith.maximumf %6, %7 : vector<8x128xf32>
    %9 = arith.truncf %8 : vector<8x128xf32> to vector<8x128xbf16>
    %c0_6 = arith.constant 0 : index
    %c0_7 = arith.constant 0 : index
    %10 = vector.load %arg4[%c0_6, %c0_7] : memref<128x128xbf16, #tpu.memory_space<vmem>>, vector<128x128xbf16>
    %cst_8 = arith.constant dense<0.000000e+00> : vector<8x128xf32>
    %11 = tpu.matmul %9, %10, %cst_8 {dimension_numbers = #tpu.dot_dimension_numbers<[1], [0], [0], [1], [0, 0, 1, 1], [], []>} : vector<8x128xbf16>, vector<128x128xbf16>, vector<8x128xf32> -> vector<8x128xf32>
    %c0_9 = arith.constant 0 : index
    %c0_10 = arith.constant 0 : index
    %12 = vector.load %arg5[%c0_9, %c0_10] : memref<1x128xf32, #tpu.memory_space<vmem>>, vector<1x128xf32>
    %13 = vector.broadcast %12 : vector<1x128xf32> to vector<8x128xf32>
    %14 = arith.addf %11, %13 : vector<8x128xf32>
    %cst_11 = arith.constant 0.000000e+00 : f32
    %15 = vector.broadcast %cst_11 : f32 to vector<8x128xf32>
    %16 = arith.maximumf %14, %15 : vector<8x128xf32>
    %17 = arith.addf %8, %16 : vector<8x128xf32>
    %18 = arith.truncf %17 : vector<8x128xf32> to vector<8x128xbf16>
    %c0_12 = arith.constant 0 : index
    %c0_13 = arith.constant 0 : index
    %19 = vector.load %arg6[%c0_12, %c0_13] : memref<128x128xbf16, #tpu.memory_space<vmem>>, vector<128x128xbf16>
    %cst_14 = arith.constant dense<0.000000e+00> : vector<8x128xf32>
    %20 = tpu.matmul %18, %19, %cst_14 {dimension_numbers = #tpu.dot_dimension_numbers<[1], [0], [0], [1], [0, 0, 1, 1], [], []>} : vector<8x128xbf16>, vector<128x128xbf16>, vector<8x128xf32> -> vector<8x128xf32>
    %c0_15 = arith.constant 0 : index
    %c0_16 = arith.constant 0 : index
    %21 = vector.load %arg7[%c0_15, %c0_16] : memref<1x128xf32, #tpu.memory_space<vmem>>, vector<1x128xf32>
    %22 = vector.broadcast %21 : vector<1x128xf32> to vector<8x128xf32>
    %23 = arith.addf %20, %22 : vector<8x128xf32>
    %c0_17 = arith.constant 0 : index
    %c0_18 = arith.constant 0 : index
    %24 = vector.load %arg8[%c0_17, %c0_18] : memref<8x128xf32, #tpu.memory_space<vmem>>, vector<8x128xf32>
    tpu.vector_store %arg8[%c0_17, %c0_18], %23 {strides = array<i32>} : memref<8x128xf32, #tpu.memory_space<vmem>>, vector<8x128xf32>,
    return
  }
  func.func @transform_0(%arg0: i32) -> (i32, i32) {
    %c0_i32 = arith.constant 0 : i32
    %c0_i32_0 = arith.constant 0 : i32
    return %arg0, %c0_i32 : i32, i32
  }
  func.func @transform_1(%arg0: i32) -> (i32, i32) {
    %c0_i32 = arith.constant 0 : i32
    %c0_i32_0 = arith.constant 0 : i32
    %c0_i32_1 = arith.constant 0 : i32
    return %c0_i32, %c0_i32_0 : i32, i32
  }
  func.func @transform_2(%arg0: i32) -> (i32, i32) {
    %c0_i32 = arith.constant 0 : i32
    %c0_i32_0 = arith.constant 0 : i32
    %c0_i32_1 = arith.constant 0 : i32
    return %c0_i32, %c0_i32_0 : i32, i32
  }
  func.func @transform_3(%arg0: i32) -> (i32, i32) {
    %c0_i32 = arith.constant 0 : i32
    %c0_i32_0 = arith.constant 0 : i32
    %c0_i32_1 = arith.constant 0 : i32
    return %c0_i32, %c0_i32_0 : i32, i32
  }
  func.func @transform_4(%arg0: i32) -> (i32, i32) {
    %c0_i32 = arith.constant 0 : i32
    %c0_i32_0 = arith.constant 0 : i32
    %c0_i32_1 = arith.constant 0 : i32
    return %c0_i32, %c0_i32_0 : i32, i32
  }
  func.func @transform_5(%arg0: i32) -> (i32, i32) {
    %c0_i32 = arith.constant 0 : i32
    %c0_i32_0 = arith.constant 0 : i32
    %c0_i32_1 = arith.constant 0 : i32
    return %c0_i32, %c0_i32_0 : i32, i32
  }
  func.func @transform_6(%arg0: i32) -> (i32, i32) {
    %c0_i32 = arith.constant 0 : i32
    %c0_i32_0 = arith.constant 0 : i32
    %c0_i32_1 = arith.constant 0 : i32
    return %c0_i32, %c0_i32_0 : i32, i32
  }
  func.func @transform_7(%arg0: i32) -> (i32, i32) {
    %c0_i32 = arith.constant 0 : i32
    %c0_i32_0 = arith.constant 0 : i32
    return %arg0, %c0_i32 : i32, i32
  }
}

module attributes {stable_mosaic.version = 11 : i64} {
  func.func @bow_kernel(%arg0: i32, %arg1: memref<8x256xf32, #tpu.memory_space<vmem>>, %arg2: memref<256x128xbf16, #tpu.memory_space<vmem>>, %arg3: memref<1x128xf32, #tpu.memory_space<vmem>>, %arg4: memref<128x128xbf16, #tpu.memory_space<vmem>>, %arg5: memref<1x128xf32, #tpu.memory_space<vmem>>, %arg6: memref<128x128xbf16, #tpu.memory_space<vmem>>, %arg7: memref<1x128xf32, #tpu.memory_space<vmem>>, %arg8: memref<8x128xf32, #tpu.memory_space<vmem>>) attributes {dimension_semantics = [#tpu.dimension_semantics<parallel>], iteration_bounds = array<i64: 1>, scalar_prefetch = 0 : i64, scratch_operands = 0 : i64, tpu.core_type = #tpu.core_type<tc>, window_params = [{transform_indices = @transform_0, window_bounds = array<i64: 8, 256>}, {pipeline_mode = #tpu.pipeline_mode<synchronous>, transform_indices = @transform_1, window_bounds = array<i64: 256, 128>}, {pipeline_mode = #tpu.pipeline_mode<synchronous>, transform_indices = @transform_2, window_bounds = array<i64: 1, 128>}, {pipeline_mode = #tpu.pipeline_mode<synchronous>, transform_indices = @transform_3, window_bounds = array<i64: 128, 128>}, {pipeline_mode = #tpu.pipeline_mode<synchronous>, transform_indices = @transform_4, window_bounds = array<i64: 1, 128>}, {pipeline_mode = #tpu.pipeline_mode<synchronous>, transform_indices = @transform_5, window_bounds = array<i64: 128, 128>}, {pipeline_mode = #tpu.pipeline_mode<synchronous>, transform_indices = @transform_6, window_bounds = array<i64: 1, 128>}, {transform_indices = @transform_7, window_bounds = array<i64: 8, 128>}]} {
    %c0 = arith.constant 0 : index
    %c0_0 = arith.constant 0 : index
    %0 = vector.load %arg1[%c0, %c0_0] : memref<8x256xf32, #tpu.memory_space<vmem>>, vector<8x256xf32>
    %1 = arith.truncf %0 : vector<8x256xf32> to vector<8x256xbf16>
    %c0_1 = arith.constant 0 : index
    %c0_2 = arith.constant 0 : index
    %2 = vector.load %arg2[%c0_1, %c0_2] : memref<256x128xbf16, #tpu.memory_space<vmem>>, vector<256x128xbf16>
    %cst = arith.constant dense<0.000000e+00> : vector<8x128xf32>
    %3 = tpu.matmul %1, %2, %cst {dimension_numbers = #tpu.dot_dimension_numbers<[1], [0], [0], [1], [0, 0, 1, 1], [], []>} : vector<8x256xbf16>, vector<256x128xbf16>, vector<8x128xf32> -> vector<8x128xf32>
    %c0_3 = arith.constant 0 : index
    %c0_4 = arith.constant 0 : index
    %4 = vector.load %arg3[%c0_3, %c0_4] : memref<1x128xf32, #tpu.memory_space<vmem>>, vector<1x128xf32>
    %5 = vector.broadcast %4 : vector<1x128xf32> to vector<8x128xf32>
    %6 = arith.addf %3, %5 : vector<8x128xf32>
    %cst_5 = arith.constant 0.000000e+00 : f32
    %7 = vector.broadcast %cst_5 : f32 to vector<8x128xf32>
    %8 = arith.maximumf %6, %7 : vector<8x128xf32>
    %9 = arith.truncf %8 : vector<8x128xf32> to vector<8x128xbf16>
    %c0_6 = arith.constant 0 : index
    %c0_7 = arith.constant 0 : index
    %10 = vector.load %arg4[%c0_6, %c0_7] : memref<128x128xbf16, #tpu.memory_space<vmem>>, vector<128x128xbf16>
    %cst_8 = arith.constant dense<0.000000e+00> : vector<8x128xf32>
    %11 = tpu.matmul %9, %10, %cst_8 {dimension_numbers = #tpu.dot_dimension_numbers<[1], [0], [0], [1], [0, 0, 1, 1], [], []>} : vector<8x128xbf16>, vector<128x128xbf16>, vector<8x128xf32> -> vector<8x128xf32>
    %c0_9 = arith.constant 0 : index
    %c0_10 = arith.constant 0 : index
    %12 = vector.load %arg5[%c0_9, %c0_10] : memref<1x128xf32, #tpu.memory_space<vmem>>, vector<1x128xf32>
    %13 = vector.broadcast %12 : vector<1x128xf32> to vector<8x128xf32>
    %14 = arith.addf %11, %13 : vector<8x128xf32>
    %cst_11 = arith.constant 0.000000e+00 : f32
    %15 = vector.broadcast %cst_11 : f32 to vector<8x128xf32>
    %16 = arith.maximumf %14, %15 : vector<8x128xf32>
    %17 = arith.addf %8, %16 : vector<8x128xf32>
    %18 = arith.truncf %17 : vector<8x128xf32> to vector<8x128xbf16>
    %c0_12 = arith.constant 0 : index
    %c0_13 = arith.constant 0 : index
    %19 = vector.load %arg6[%c0_12, %c0_13] : memref<128x128xbf16, #tpu.memory_space<vmem>>, vector<128x128xbf16>
    %cst_14 = arith.constant dense<0.000000e+00> : vector<8x128xf32>
    %20 = tpu.matmul %18, %19, %cst_14 {dimension_numbers = #tpu.dot_dimension_numbers<[1], [0], [0], [1], [0, 0, 1, 1], [], []>} : vector<8x128xbf16>, vector<128x128xbf16>, vector<8x128xf32> -> vector<8x128xf32>
    %c0_15 = arith.constant 0 : index
    %c0_16 = arith.constant 0 : index
    %21 = vector.load %arg7[%c0_15, %c0_16] : memref<1x128xf32, #tpu.memory_space<vmem>>, vector<1x128xf32>
    %22 = vector.broadcast %21 : vector<1x128xf32> to vector<8x128xf32>
    %23 = arith.addf %20, %22 : vector<8x128xf32>
    %c0_17 = arith.constant 0 : index
    %c0_18 = arith.constant 0 : index
    %24 = vector.load %arg8[%c0_17, %c0_18] : memref<8x128xf32, #tpu.memory_space<vmem>>, vector<8x128xf32>
    tpu.vector_store %arg8[%c0_17, %c0_18], %23 {strides = array<i32>} : memref<8x128xf32, #tpu.memory_space<vmem>>, vector<8x128xf32>,
    return
  }
  func.func @transform_0(%arg0: i32) -> (i32, i32) {
    %c0_i32 = arith.constant 0 : i32
    %c0_i32_0 = arith.constant 0 : i32
    return %arg0, %c0_i32 : i32, i32
  }
  func.func @transform_1(%arg0: i32) -> (i32, i32) {
    %c0_i32 = arith.constant 0 : i32
    %c0_i32_0 = arith.constant 0 : i32
    %c0_i32_1 = arith.constant 0 : i32
    return %c0_i32, %c0_i32_0 : i32, i32
  }
  func.func @transform_2(%arg0: i32) -> (i32, i32) {
    %c0_i32 = arith.constant 0 : i32
    %c0_i32_0 = arith.constant 0 : i32
    %c0_i32_1 = arith.constant 0 : i32
    return %c0_i32, %c0_i32_0 : i32, i32
  }
  func.func @transform_3(%arg0: i32) -> (i32, i32) {
    %c0_i32 = arith.constant 0 : i32
    %c0_i32_0 = arith.constant 0 : i32
    %c0_i32_1 = arith.constant 0 : i32
    return %c0_i32, %c0_i32_0 : i32, i32
  }
  func.func @transform_4(%arg0: i32) -> (i32, i32) {
    %c0_i32 = arith.constant 0 : i32
    %c0_i32_0 = arith.constant 0 : i32
    %c0_i32_1 = arith.constant 0 : i32
    return %c0_i32, %c0_i32_0 : i32, i32
  }
  func.func @transform_5(%arg0: i32) -> (i32, i32) {
    %c0_i32 = arith.constant 0 : i32
    %c0_i32_0 = arith.constant 0 : i32
    %c0_i32_1 = arith.constant 0 : i32
    return %c0_i32, %c0_i32_0 : i32, i32
  }
  func.func @transform_6(%arg0: i32) -> (i32, i32) {
    %c0_i32 = arith.constant 0 : i32
    %c0_i32_0 = arith.constant 0 : i32
    %c0_i32_1 = arith.constant 0 : i32
    return %c0_i32, %c0_i32_0 : i32, i32
  }
  func.func @transform_7(%arg0: i32) -> (i32, i32) {
    %c0_i32 = arith.constant 0 : i32
    %c0_i32_0 = arith.constant 0 : i32
    return %arg0, %c0_i32 : i32, i32
  }
}

</mosaic_0001>

<llo_original>
// kernel: _bow_forward.1
$region0: #{_bow_forward.1}
  #allocation0 [shape = 'u32[]', space=smem, size = 0x4, offset = 0x4, fixed_abs, tag = 'smem constant byte address 0x4 - core index']
  #allocation1 [shape = 'u32[72,128]{1,0:T(1,128)}', space=vmem, size = 0x9000, scoped, tag = 'internal scratch']
  %s0 = inlined_call_operand.hbm [shape: f32[8,256], index: 0, kind: input, shape index: {}]
  %s1 = inlined_call_operand.hbm [shape: bf16[256,128], index: 1, kind: input, shape index: {}]
  %s2 = inlined_call_operand.vmem [shape: f32[1,128], index: 2, kind: input, shape index: {}]
  %s3 = inlined_call_operand.hbm [shape: bf16[128,128], index: 3, kind: input, shape index: {}]
  %s4 = inlined_call_operand.vmem [shape: f32[1,128], index: 4, kind: input, shape index: {}]
  %s5 = inlined_call_operand.hbm [shape: bf16[128,128], index: 5, kind: input, shape index: {}]
  %s6 = inlined_call_operand.vmem [shape: f32[1,128], index: 6, kind: input, shape index: {}]
  %s7 = inlined_call_operand.hbm [shape: f32[8,128], index: 7, kind: output, shape index: {}]
  %s8 = sld [smem:[#allocation0]]
  $region54: #{_bow_forward.1} parent=0
    _
  %s10 = ssub.s32 1, %s8
  %s11 = scalar_select 0, %s10, %s8
  $region1: #{_bow_forward.1} parent=0
    #allocation2 [shape = 'u8[8192]{0}', space=vmem, size = 0x2000, scoped, tag = 'input window, operand 0, single buffered']
    #allocation3 [shape = 's32[1]{0}', space=sflag, size = 0x4, scoped, tag = 'scoped memory for _bow_forward.1']
    #allocation4 [shape = 's32[1]{0}', space=sflag, size = 0x4, scoped, tag = 'scoped memory for _bow_forward.1']
    #allocation5 [shape = 'u8[65536]{0}', space=vmem, size = 0x10000, scoped, tag = 'input window, operand 1, single buffered']
    #allocation6 [shape = 's32[1]{0}', space=sflag, size = 0x4, scoped, tag = 'scoped memory for _bow_forward.1']
    #allocation7 [shape = 'u8[32768]{0}', space=vmem, size = 0x8000, scoped, tag = 'input window, operand 3, single buffered']
    #allocation8 [shape = 'u8[32768]{0}', space=vmem, size = 0x8000, scoped, tag = 'input window, operand 5, single buffered']
    #allocation9 [shape = 's32[1]{0}', space=sflag, size = 0x4, scoped, tag = 'scoped memory for _bow_forward.1']
    #allocation10 [shape = 'u8[4096]{0}', space=vmem, size = 0x1000, scoped, tag = 'output window, operand 0, single buffered']
    %12 = vsyncpa [#allocation3], 0
    %13 = vsyncpa [#allocation6], 0
    %14 = vsyncpa [#allocation9], 0
    %15 = vsyncpa [#allocation4], 0
    // Predicated region
    $region2: #{_bow_forward.1} parent=1 // pred_check
      _
    $region3: #{_bow_forward.1} parent=1 // pred_check_branch
      %17 = sbr.rel (0) target = $region5
    $region4: #{_bow_forward.1} parent=1 // pred_region
      %19 = vsyncadd [#allocation3], 0
      %s21 = sshll.u32 %s0, 4
      %s22 = int_to_ptr.hbm [resolvable:$true] %s21
      %s23 = sshll.u32 [#allocation2], 4
      %s24 = int_to_ptr.vmem [resolvable:$true] %s23
      %26 = dma.hbm_to_vmem [thread:$0]  %s22, 256, %s24, [#allocation3]
    $region5: #{_bow_forward.1} parent=1 // pred_fallthru
      _
    // Predicated region
    $region6: #{_bow_forward.1} parent=1 // pred_check
      _
    $region7: #{_bow_forward.1} parent=1 // pred_check_branch
      %28 = sbr.rel (0) target = $region9
    $region8: #{_bow_forward.1} parent=1 // pred_region
      %30 = vsyncadd [#allocation6], 0
      %s31 = sshll.u32 %s1, 4
      %s32 = int_to_ptr.hbm [resolvable:$true] %s31
      %s33 = sshll.u32 [#allocation5], 4
      %s34 = int_to_ptr.vmem [resolvable:$true] %s33
      %39 = dma.hbm_to_vmem [thread:$0]  %s32, 2048, %s34, [#allocation6], 64, 64, 4
    $region9: #{_bow_forward.1} parent=1 // pred_fallthru
      _
    // Predicated region
    $region10: #{_bow_forward.1} parent=1 // pred_check
      _
    $region11: #{_bow_forward.1} parent=1 // pred_check_branch
      %41 = sbr.rel (0) target = $region13
    $region12: #{_bow_forward.1} parent=1 // pred_region
      _
    $region13: #{_bow_forward.1} parent=1 // pred_fallthru
      _
    // Predicated region
    $region14: #{_bow_forward.1} parent=1 // pred_check
      _
    $region15: #{_bow_forward.1} parent=1 // pred_check_branch
      %43 = sbr.rel (0) target = $region17
    $region16: #{_bow_forward.1} parent=1 // pred_region
      %45 = vsyncadd [#allocation6], 0
      %s46 = sshll.u32 %s3, 4
      %s47 = int_to_ptr.hbm [resolvable:$true] %s46
      %s48 = sshll.u32 [#allocation7], 4
      %s49 = int_to_ptr.vmem [resolvable:$true] %s48
      %54 = dma.hbm_to_vmem [thread:$0]  %s47, 1024, %s49, [#allocation6], 64, 64, 4
    $region17: #{_bow_forward.1} parent=1 // pred_fallthru
      _
    // Predicated region
    $region18: #{_bow_forward.1} parent=1 // pred_check
      _
    $region19: #{_bow_forward.1} parent=1 // pred_check_branch
      %56 = sbr.rel (0) target = $region21
    $region20: #{_bow_forward.1} parent=1 // pred_region
      _
    $region21: #{_bow_forward.1} parent=1 // pred_fallthru
      _
    // Predicated region
    $region22: #{_bow_forward.1} parent=1 // pred_check
      _
    $region23: #{_bow_forward.1} parent=1 // pred_check_branch
      %58 = sbr.rel (0) target = $region25
    $region24: #{_bow_forward.1} parent=1 // pred_region
      %60 = vsyncadd [#allocation9], 0
      %s61 = sshll.u32 %s5, 4
      %s62 = int_to_ptr.hbm [resolvable:$true] %s61
      %s63 = sshll.u32 [#allocation8], 4
      %s64 = int_to_ptr.vmem [resolvable:$true] %s63
      %69 = dma.hbm_to_vmem [thread:$0]  %s62, 1024, %s64, [#allocation9], 64, 64, 4
    $region25: #{_bow_forward.1} parent=1 // pred_fallthru
      _
    // Predicated region
    $region26: #{_bow_forward.1} parent=1 // pred_check
      _
    $region27: #{_bow_forward.1} parent=1 // pred_check_branch
      %71 = sbr.rel (0) target = $region29
    $region28: #{_bow_forward.1} parent=1 // pred_region
      _
    $region29: #{_bow_forward.1} parent=1 // pred_fallthru
      _
    // Predicated region
    $region30: #{_bow_forward.1} parent=1 // pred_check
      _
    $region31: #{_bow_forward.1} parent=1 // pred_check_branch
      %73 = sbr.rel (0) target = $region33
    $region32: #{_bow_forward.1} parent=1 // pred_region
      %75 = dma.done [#allocation3], 256
    $region33: #{_bow_forward.1} parent=1 // pred_fallthru
      _
    // Predicated region
    $region34: #{_bow_forward.1} parent=1 // pred_check
      _
    $region35: #{_bow_forward.1} parent=1 // pred_check_branch
      %77 = sbr.rel (0) target = $region37
    $region36: #{_bow_forward.1} parent=1 // pred_region
      %79 = dma.done [#allocation6], 2048
    $region37: #{_bow_forward.1} parent=1 // pred_fallthru
      _
    // Predicated region
    $region38: #{_bow_forward.1} parent=1 // pred_check
      _
    $region39: #{_bow_forward.1} parent=1 // pred_check_branch
      %81 = sbr.rel (0) target = $region41
    $region40: #{_bow_forward.1} parent=1 // pred_region
      %83 = dma.done [#allocation6], 1024
    $region41: #{_bow_forward.1} parent=1 // pred_fallthru
      _
    // Predicated region
    $region42: #{_bow_forward.1} parent=1 // pred_check
      _
    $region43: #{_bow_forward.1} parent=1 // pred_check_branch
      %85 = sbr.rel (0) target = $region45
    $region44: #{_bow_forward.1} parent=1 // pred_region
      %87 = dma.done [#allocation9], 1024
    $region45: #{_bow_forward.1} parent=1 // pred_fallthru
      _
    %v88 = vld [vmem:[#allocation2] sm:$0xff]
    %v89 = vld [vmem:[#allocation2 + $0x8] sm:$0xff]
    %v90 = vpack.c.bf16 %v88, %v88
    %v91 = vpack.c.bf16 %v89, %v89
    %v92 = vld [vmem:[#allocation5] sm:$0xf]
    %v93 = vld [vmem:[#allocation5 + $0x4] sm:$0xf]
    %v94 = vld [vmem:[#allocation5 + $0x8] sm:$0xf]
    %v95 = vld [vmem:[#allocation5 + $0xc] sm:$0xf]
    %v96 = vld [vmem:[#allocation5 + $0x10] sm:$0xf]
    %v97 = vld [vmem:[#allocation5 + $0x14] sm:$0xf]
    %v98 = vld [vmem:[#allocation5 + $0x18] sm:$0xf]
    %v99 = vld [vmem:[#allocation5 + $0x1c] sm:$0xf]
    %v100 = vld [vmem:[#allocation5 + $0x20] sm:$0xf]
    %v101 = vld [vmem:[#allocation5 + $0x24] sm:$0xf]
    %v102 = vld [vmem:[#allocation5 + $0x28] sm:$0xf]
    %v103 = vld [vmem:[#allocation5 + $0x2c] sm:$0xf]
    %v104 = vld [vmem:[#allocation5 + $0x30] sm:$0xf]
    %v105 = vld [vmem:[#allocation5 + $0x34] sm:$0xf]
    %v106 = vld [vmem:[#allocation5 + $0x38] sm:$0xf]
    %v107 = vld [vmem:[#allocation5 + $0x3c] sm:$0xf]
    %v108 = vld [vmem:[#allocation5 + $0x40] sm:$0xf]
    %v109 = vld [vmem:[#allocation5 + $0x44] sm:$0xf]
    %v110 = vld [vmem:[#allocation5 + $0x48] sm:$0xf]
    %v111 = vld [vmem:[#allocation5 + $0x4c] sm:$0xf]
    %v112 = vld [vmem:[#allocation5 + $0x50] sm:$0xf]
    %v113 = vld [vmem:[#allocation5 + $0x54] sm:$0xf]
    %v114 = vld [vmem:[#allocation5 + $0x58] sm:$0xf]
    %v115 = vld [vmem:[#allocation5 + $0x5c] sm:$0xf]
    %v116 = vld [vmem:[#allocation5 + $0x60] sm:$0xf]
    %v117 = vld [vmem:[#allocation5 + $0x64] sm:$0xf]
    %v118 = vld [vmem:[#allocation5 + $0x68] sm:$0xf]
    %v119 = vld [vmem:[#allocation5 + $0x6c] sm:$0xf]
    %v120 = vld [vmem:[#allocation5 + $0x70] sm:$0xf]
    %v121 = vld [vmem:[#allocation5 + $0x74] sm:$0xf]
    %v122 = vld [vmem:[#allocation5 + $0x78] sm:$0xf]
    %v123 = vld [vmem:[#allocation5 + $0x7c] sm:$0xf]
    %v124 = vld [vmem:[%s2] sm:$0x1]
    %v126 = vperm.slane %v124, 0
    %v160 = vunpack.c.l.b16 %v92
    %v161 = vunpack.c.l.b16 %v93
    %v162 = vunpack.c.l.b16 %v94
    %v163 = vunpack.c.l.b16 %v95
    %v164 = vunpack.c.l.b16 %v96
    %v165 = vunpack.c.l.b16 %v97
    %v166 = vunpack.c.l.b16 %v98
    %v167 = vunpack.c.l.b16 %v99
    %v168 = vunpack.c.l.b16 %v100
    %v169 = vunpack.c.l.b16 %v101
    %v170 = vunpack.c.l.b16 %v102
    %v171 = vunpack.c.l.b16 %v103
    %v172 = vunpack.c.l.b16 %v104
    %v173 = vunpack.c.l.b16 %v105
    %v174 = vunpack.c.l.b16 %v106
    %v175 = vunpack.c.l.b16 %v107
    %v176 = vunpack.c.l.b16 %v108
    %v177 = vunpack.c.l.b16 %v109
    %v178 = vunpack.c.l.b16 %v110
    %v179 = vunpack.c.l.b16 %v111
    %v180 = vunpack.c.l.b16 %v112
    %v181 = vunpack.c.l.b16 %v113
    %v182 = vunpack.c.l.b16 %v114
    %v183 = vunpack.c.l.b16 %v115
    %v184 = vunpack.c.l.b16 %v116
    %v185 = vunpack.c.l.b16 %v117
    %v186 = vunpack.c.l.b16 %v118
    %v187 = vunpack.c.l.b16 %v119
    %v188 = vunpack.c.l.b16 %v120
    %v189 = vunpack.c.l.b16 %v121
    %v190 = vunpack.c.l.b16 %v122
    %v191 = vunpack.c.l.b16 %v123
    %v192 = vpack.c.b16 %v161, %v160
    %v193 = vpack.c.b16 %v163, %v162
    %v194 = vpack.c.b16 %v165, %v164
    %v195 = vpack.c.b16 %v167, %v166
    %v196 = vpack.c.b16 %v169, %v168
    %v197 = vpack.c.b16 %v171, %v170
    %v198 = vpack.c.b16 %v173, %v172
    %v199 = vpack.c.b16 %v175, %v174
    %v200 = vpack.c.b16 %v177, %v176
    %v201 = vpack.c.b16 %v179, %v178
    %v202 = vpack.c.b16 %v181, %v180
    %v203 = vpack.c.b16 %v183, %v182
    %v204 = vpack.c.b16 %v185, %v184
    %v205 = vpack.c.b16 %v187, %v186
    %v206 = vpack.c.b16 %v189, %v188
    %v207 = vpack.c.b16 %v191, %v190
    %224 = vmatpush.bf16.msra.mxu0 %v199
    %225 = vmatpush.bf16.msra.mxu0 %v198
    %226 = vmatpush.bf16.msra.mxu0 %v197
    %227 = vmatpush.bf16.msra.mxu0 %v196
    %228 = vmatpush.bf16.msra.mxu0 %v195
    %229 = vmatpush.bf16.msra.mxu0 %v194
    %230 = vmatpush.bf16.msra.mxu0 %v193
    %231 = vmatpush.bf16.msra.mxu0 %v192
    %232 = vmatmul.bf16.gmra.mxu0 %v90
    %v233 = vpop.f32.mrf.mxu0
    %v234 = vadd.f32 %v126, %v233
    %v235 = vpop.f32.mrf.mxu0
    %236 = vdwg.mxu0
    %237 = vmatpush.bf16.msra.mxu0 %v207
    %238 = vmatpush.bf16.msra.mxu0 %v206
    %239 = vmatpush.bf16.msra.mxu0 %v205
    %240 = vmatpush.bf16.msra.mxu0 %v204
    %241 = vmatpush.bf16.msra.mxu0 %v203
    %242 = vmatpush.bf16.msra.mxu0 %v202
    %243 = vmatpush.bf16.msra.mxu0 %v201
    %244 = vmatpush.bf16.msra.mxu0 %v200
    %245 = vmatmul.bf16.gmra.mxu0 %v91
    %v246 = vpop.f32.mrf.mxu0
    %v247 = vadd.f32 %v234, %v246
    %v248 = vpop.f32.mrf.mxu0
    %249 = vdwg.mxu0
    %v250 = vmax.f32 %v247, 0.0
    %v251 = vpack.c.bf16 %v250, %v250
    %v252 = vld [vmem:[#allocation7] sm:$0xf]
    %v253 = vld [vmem:[#allocation7 + $0x4] sm:$0xf]
    %v254 = vld [vmem:[#allocation7 + $0x8] sm:$0xf]
    %v255 = vld [vmem:[#allocation7 + $0xc] sm:$0xf]
    %v256 = vld [vmem:[#allocation7 + $0x10] sm:$0xf]
    %v257 = vld [vmem:[#allocation7 + $0x14] sm:$0xf]
    %v258 = vld [vmem:[#allocation7 + $0x18] sm:$0xf]
    %v259 = vld [vmem:[#allocation7 + $0x1c] sm:$0xf]
    %v260 = vld [vmem:[#allocation7 + $0x20] sm:$0xf]
    %v261 = vld [vmem:[#allocation7 + $0x24] sm:$0xf]
    %v262 = vld [vmem:[#allocation7 + $0x28] sm:$0xf]
    %v263 = vld [vmem:[#allocation7 + $0x2c] sm:$0xf]
    %v264 = vld [vmem:[#allocation7 + $0x30] sm:$0xf]
    %v265 = vld [vmem:[#allocation7 + $0x34] sm:$0xf]
    %v266 = vld [vmem:[#allocation7 + $0x38] sm:$0xf]
    %v267 = vld [vmem:[#allocation7 + $0x3c] sm:$0xf]
    %v268 = vld [vmem:[%s4] sm:$0x1]
    %v270 = vperm.slane %v268, 0
    %v288 = vunpack.c.l.b16 %v252
    %v289 = vunpack.c.l.b16 %v253
    %v290 = vunpack.c.l.b16 %v254
    %v291 = vunpack.c.l.b16 %v255
    %v292 = vunpack.c.l.b16 %v256
    %v293 = vunpack.c.l.b16 %v257
    %v294 = vunpack.c.l.b16 %v258
    %v295 = vunpack.c.l.b16 %v259
    %v296 = vunpack.c.l.b16 %v260
    %v297 = vunpack.c.l.b16 %v261
    %v298 = vunpack.c.l.b16 %v262
    %v299 = vunpack.c.l.b16 %v263
    %v300 = vunpack.c.l.b16 %v264
    %v301 = vunpack.c.l.b16 %v265
    %v302 = vunpack.c.l.b16 %v266
    %v303 = vunpack.c.l.b16 %v267
    %v304 = vpack.c.b16 %v289, %v288
    %v305 = vpack.c.b16 %v291, %v290
    %v306 = vpack.c.b16 %v293, %v292
    %v307 = vpack.c.b16 %v295, %v294
    %v308 = vpack.c.b16 %v297, %v296
    %v309 = vpack.c.b16 %v299, %v298
    %v310 = vpack.c.b16 %v301, %v300
    %v311 = vpack.c.b16 %v303, %v302
    %320 = vmatpush.bf16.msra.mxu0 %v311
    %321 = vmatpush.bf16.msra.mxu0 %v310
    %322 = vmatpush.bf16.msra.mxu0 %v309
    %323 = vmatpush.bf16.msra.mxu0 %v308
    %324 = vmatpush.bf16.msra.mxu0 %v307
    %325 = vmatpush.bf16.msra.mxu0 %v306
    %326 = vmatpush.bf16.msra.mxu0 %v305
    %327 = vmatpush.bf16.msra.mxu0 %v304
    %328 = vmatmul.bf16.gmra.mxu0 %v251
    %v329 = vpop.f32.mrf.mxu0
    %v330 = vadd.f32 %v270, %v329
    %v331 = vpop.f32.mrf.mxu0
    %332 = vdwg.mxu0
    %v333 = vmax.f32 %v330, 0.0
    %v334 = vadd.f32 %v250, %v333
    %v335 = vpack.c.bf16 %v334, %v334
    %v336 = vld [vmem:[#allocation8] sm:$0xf]
    %v337 = vld [vmem:[#allocation8 + $0x4] sm:$0xf]
    %v338 = vld [vmem:[#allocation8 + $0x8] sm:$0xf]
    %v339 = vld [vmem:[#allocation8 + $0xc] sm:$0xf]
    %v340 = vld [vmem:[#allocation8 + $0x10] sm:$0xf]
    %v341 = vld [vmem:[#allocation8 + $0x14] sm:$0xf]
    %v342 = vld [vmem:[#allocation8 + $0x18] sm:$0xf]
    %v343 = vld [vmem:[#allocation8 + $0x1c] sm:$0xf]
    %v344 = vld [vmem:[#allocation8 + $0x20] sm:$0xf]
    %v345 = vld [vmem:[#allocation8 + $0x24] sm:$0xf]
    %v346 = vld [vmem:[#allocation8 + $0x28] sm:$0xf]
    %v347 = vld [vmem:[#allocation8 + $0x2c] sm:$0xf]
    %v348 = vld [vmem:[#allocation8 + $0x30] sm:$0xf]
    %v349 = vld [vmem:[#allocation8 + $0x34] sm:$0xf]
    %v350 = vld [vmem:[#allocation8 + $0x38] sm:$0xf]
    %v351 = vld [vmem:[#allocation8 + $0x3c] sm:$0xf]
    %v352 = vld [vmem:[%s6] sm:$0x1]
    %v354 = vperm.slane %v352, 0
    %v372 = vunpack.c.l.b16 %v336
    %v373 = vunpack.c.l.b16 %v337
    %v374 = vunpack.c.l.b16 %v338
    %v375 = vunpack.c.l.b16 %v339
    %v376 = vunpack.c.l.b16 %v340
    %v377 = vunpack.c.l.b16 %v341
    %v378 = vunpack.c.l.b16 %v342
    %v379 = vunpack.c.l.b16 %v343
    %v380 = vunpack.c.l.b16 %v344
    %v381 = vunpack.c.l.b16 %v345
    %v382 = vunpack.c.l.b16 %v346
    %v383 = vunpack.c.l.b16 %v347
    %v384 = vunpack.c.l.b16 %v348
    %v385 = vunpack.c.l.b16 %v349
    %v386 = vunpack.c.l.b16 %v350
    %v387 = vunpack.c.l.b16 %v351
    %v388 = vpack.c.b16 %v373, %v372
    %v389 = vpack.c.b16 %v375, %v374
    %v390 = vpack.c.b16 %v377, %v376
    %v391 = vpack.c.b16 %v379, %v378
    %v392 = vpack.c.b16 %v381, %v380
    %v393 = vpack.c.b16 %v383, %v382
    %v394 = vpack.c.b16 %v385, %v384
    %v395 = vpack.c.b16 %v387, %v386
    %404 = vmatpush.bf16.msra.mxu0 %v395
    %405 = vmatpush.bf16.msra.mxu0 %v394
    %406 = vmatpush.bf16.msra.mxu0 %v393
    %407 = vmatpush.bf16.msra.mxu0 %v392
    %408 = vmatpush.bf16.msra.mxu0 %v391
    %409 = vmatpush.bf16.msra.mxu0 %v390
    %410 = vmatpush.bf16.msra.mxu0 %v389
    %411 = vmatpush.bf16.msra.mxu0 %v388
    %412 = vmatmul.bf16.gmra.mxu0 %v335
    %v413 = vpop.f32.mrf.mxu0
    %v414 = vadd.f32 %v354, %v413
    %v415 = vpop.f32.mrf.mxu0
    %416 = vdwg.mxu0
    %417 = vst [vmem:[#allocation10] sm:$0xff] %v414
    // Predicated region
    $region46: #{_bow_forward.1} parent=1 // pred_check
      _
    $region47: #{_bow_forward.1} parent=1 // pred_check_branch
      %419 = sbr.rel (0) target = $region49
    $region48: #{_bow_forward.1} parent=1 // pred_region
      %421 = vsyncadd [#allocation4], 0
      %s423 = sshll.u32 [#allocation10], 4
      %s424 = int_to_ptr.vmem [resolvable:$true] %s423
      %s425 = sshll.u32 %s7, 4
      %s426 = int_to_ptr.hbm [resolvable:$true] %s425
      %428 = dma.vmem_to_hbm [thread:$0]  %s424, 128, %s426, [#allocation4]
    $region49: #{_bow_forward.1} parent=1 // pred_fallthru
      _
    // Predicated region
    $region50: #{_bow_forward.1} parent=1 // pred_check
      _
    $region51: #{_bow_forward.1} parent=1 // pred_check_branch
      %430 = sbr.rel (0) target = $region53
    $region52: #{_bow_forward.1} parent=1 // pred_region
      %432 = dma.done [#allocation4], 128
    $region53: #{_bow_forward.1} parent=1 // pred_fallthru
      _
    %433 = vsyncpa [#allocation3], 1
    %434 = vsyncpa [#allocation6], 1
    %435 = vsyncpa [#allocation9], 1
    %436 = vsyncpa [#allocation4], 1

// kernel: _bow_forward.1
$region0: #{_bow_forward.1}
  #allocation0 [shape = 'u32[]', space=smem, size = 0x4, offset = 0x4, fixed_abs, tag = 'smem constant byte address 0x4 - core index']
  #allocation1 [shape = 'u32[72,128]{1,0:T(1,128)}', space=vmem, size = 0x9000, scoped, tag = 'internal scratch']
  %s0 = inlined_call_operand.hbm [shape: f32[8,256], index: 0, kind: input, shape index: {}]
  %s1 = inlined_call_operand.hbm [shape: bf16[256,128], index: 1, kind: input, shape index: {}]
  %s2 = inlined_call_operand.vmem [shape: f32[1,128], index: 2, kind: input, shape index: {}]
  %s3 = inlined_call_operand.hbm [shape: bf16[128,128], index: 3, kind: input, shape index: {}]
  %s4 = inlined_call_operand.vmem [shape: f32[1,128], index: 4, kind: input, shape index: {}]
  %s5 = inlined_call_operand.hbm [shape: bf16[128,128], index: 5, kind: input, shape index: {}]
  %s6 = inlined_call_operand.vmem [shape: f32[1,128], index: 6, kind: input, shape index: {}]
  %s7 = inlined_call_operand.hbm [shape: f32[8,128], index: 7, kind: output, shape index: {}]
  %s8 = sld [smem:[#allocation0]]
  $region54: #{_bow_forward.1} parent=0
    _
  %s10 = ssub.s32 1, %s8
  %s11 = scalar_select 0, %s10, %s8
  $region1: #{_bow_forward.1} parent=0
    #allocation2 [shape = 'u8[8192]{0}', space=vmem, size = 0x2000, scoped, tag = 'input window, operand 0, single buffered']
    #allocation3 [shape = 's32[1]{0}', space=sflag, size = 0x4, scoped, tag = 'scoped memory for _bow_forward.1']
    #allocation4 [shape = 's32[1]{0}', space=sflag, size = 0x4, scoped, tag = 'scoped memory for _bow_forward.1']
    #allocation5 [shape = 'u8[65536]{0}', space=vmem, size = 0x10000, scoped, tag = 'input window, operand 1, single buffered']
    #allocation6 [shape = 's32[1]{0}', space=sflag, size = 0x4, scoped, tag = 'scoped memory for _bow_forward.1']
    #allocation7 [shape = 'u8[32768]{0}', space=vmem, size = 0x8000, scoped, tag = 'input window, operand 3, single buffered']
    #allocation8 [shape = 'u8[32768]{0}', space=vmem, size = 0x8000, scoped, tag = 'input window, operand 5, single buffered']
    #allocation9 [shape = 's32[1]{0}', space=sflag, size = 0x4, scoped, tag = 'scoped memory for _bow_forward.1']
    #allocation10 [shape = 'u8[4096]{0}', space=vmem, size = 0x1000, scoped, tag = 'output window, operand 0, single buffered']
    %12 = vsyncpa [#allocation3], 0
    %13 = vsyncpa [#allocation6], 0
    %14 = vsyncpa [#allocation9], 0
    %15 = vsyncpa [#allocation4], 0
    // Predicated region
    $region2: #{_bow_forward.1} parent=1 // pred_check
      _
    $region3: #{_bow_forward.1} parent=1 // pred_check_branch
      %17 = sbr.rel (0) target = $region5
    $region4: #{_bow_forward.1} parent=1 // pred_region
      %19 = vsyncadd [#allocation3], 0
      %s21 = sshll.u32 %s0, 4
      %s22 = int_to_ptr.hbm [resolvable:$true] %s21
      %s23 = sshll.u32 [#allocation2], 4
      %s24 = int_to_ptr.vmem [resolvable:$true] %s23
      %26 = dma.hbm_to_vmem [thread:$0]  %s22, 256, %s24, [#allocation3]
    $region5: #{_bow_forward.1} parent=1 // pred_fallthru
      _
    // Predicated region
    $region6: #{_bow_forward.1} parent=1 // pred_check
      _
    $region7: #{_bow_forward.1} parent=1 // pred_check_branch
      %28 = sbr.rel (0) target = $region9
    $region8: #{_bow_forward.1} parent=1 // pred_region
      %30 = vsyncadd [#allocation6], 0
      %s31 = sshll.u32 %s1, 4
      %s32 = int_to_ptr.hbm [resolvable:$true] %s31
      %s33 = sshll.u32 [#allocation5], 4
      %s34 = int_to_ptr.vmem [resolvable:$true] %s33
      %39 = dma.hbm_to_vmem [thread:$0]  %s32, 2048, %s34, [#allocation6], 64, 64, 4
    $region9: #{_bow_forward.1} parent=1 // pred_fallthru
      _
    // Predicated region
    $region10: #{_bow_forward.1} parent=1 // pred_check
      _
    $region11: #{_bow_forward.1} parent=1 // pred_check_branch
      %41 = sbr.rel (0) target = $region13
    $region12: #{_bow_forward.1} parent=1 // pred_region
      _
    $region13: #{_bow_forward.1} parent=1 // pred_fallthru
      _
    // Predicated region
    $region14: #{_bow_forward.1} parent=1 // pred_check
      _
    $region15: #{_bow_forward.1} parent=1 // pred_check_branch
      %43 = sbr.rel (0) target = $region17
    $region16: #{_bow_forward.1} parent=1 // pred_region
      %45 = vsyncadd [#allocation6], 0
      %s46 = sshll.u32 %s3, 4
      %s47 = int_to_ptr.hbm [resolvable:$true] %s46
      %s48 = sshll.u32 [#allocation7], 4
      %s49 = int_to_ptr.vmem [resolvable:$true] %s48
      %54 = dma.hbm_to_vmem [thread:$0]  %s47, 1024, %s49, [#allocation6], 64, 64, 4
    $region17: #{_bow_forward.1} parent=1 // pred_fallthru
      _
    // Predicated region
    $region18: #{_bow_forward.1} parent=1 // pred_check
      _
    $region19: #{_bow_forward.1} parent=1 // pred_check_branch
      %56 = sbr.rel (0) target = $region21
    $region20: #{_bow_forward.1} parent=1 // pred_region
      _
    $region21: #{_bow_forward.1} parent=1 // pred_fallthru
      _
    // Predicated region
    $region22: #{_bow_forward.1} parent=1 // pred_check
      _
    $region23: #{_bow_forward.1} parent=1 // pred_check_branch
      %58 = sbr.rel (0) target = $region25
    $region24: #{_bow_forward.1} parent=1 // pred_region
      %60 = vsyncadd [#allocation9], 0
      %s61 = sshll.u32 %s5, 4
      %s62 = int_to_ptr.hbm [resolvable:$true] %s61
      %s63 = sshll.u32 [#allocation8], 4
      %s64 = int_to_ptr.vmem [resolvable:$true] %s63
      %69 = dma.hbm_to_vmem [thread:$0]  %s62, 1024, %s64, [#allocation9], 64, 64, 4
    $region25: #{_bow_forward.1} parent=1 // pred_fallthru
      _
    // Predicated region
    $region26: #{_bow_forward.1} parent=1 // pred_check
      _
    $region27: #{_bow_forward.1} parent=1 // pred_check_branch
      %71 = sbr.rel (0) target = $region29
    $region28: #{_bow_forward.1} parent=1 // pred_region
      _
    $region29: #{_bow_forward.1} parent=1 // pred_fallthru
      _
    // Predicated region
    $region30: #{_bow_forward.1} parent=1 // pred_check
      _
    $region31: #{_bow_forward.1} parent=1 // pred_check_branch
      %73 = sbr.rel (0) target = $region33
    $region32: #{_bow_forward.1} parent=1 // pred_region
      %75 = dma.done [#allocation3], 256
    $region33: #{_bow_forward.1} parent=1 // pred_fallthru
      _
    // Predicated region
    $region34: #{_bow_forward.1} parent=1 // pred_check
      _
    $region35: #{_bow_forward.1} parent=1 // pred_check_branch
      %77 = sbr.rel (0) target = $region37
    $region36: #{_bow_forward.1} parent=1 // pred_region
      %79 = dma.done [#allocation6], 2048
    $region37: #{_bow_forward.1} parent=1 // pred_fallthru
      _
    // Predicated region
    $region38: #{_bow_forward.1} parent=1 // pred_check
      _
    $region39: #{_bow_forward.1} parent=1 // pred_check_branch
      %81 = sbr.rel (0) target = $region41
    $region40: #{_bow_forward.1} parent=1 // pred_region
      %83 = dma.done [#allocation6], 1024
    $region41: #{_bow_forward.1} parent=1 // pred_fallthru
      _
    // Predicated region
    $region42: #{_bow_forward.1} parent=1 // pred_check
      _
    $region43: #{_bow_forward.1} parent=1 // pred_check_branch
      %85 = sbr.rel (0) target = $region45
    $region44: #{_bow_forward.1} parent=1 // pred_region
      %87 = dma.done [#allocation9], 1024
    $region45: #{_bow_forward.1} parent=1 // pred_fallthru
      _
    %v88 = vld [vmem:[#allocation2] sm:$0xff]
    %v89 = vld [vmem:[#allocation2 + $0x8] sm:$0xff]
    %v90 = vpack.c.bf16 %v88, %v88
    %v91 = vpack.c.bf16 %v89, %v89
    %v92 = vld [vmem:[#allocation5] sm:$0xf]
    %v93 = vld [vmem:[#allocation5 + $0x4] sm:$0xf]
    %v94 = vld [vmem:[#allocation5 + $0x8] sm:$0xf]
    %v95 = vld [vmem:[#allocation5 + $0xc] sm:$0xf]
    %v96 = vld [vmem:[#allocation5 + $0x10] sm:$0xf]
    %v97 = vld [vmem:[#allocation5 + $0x14] sm:$0xf]
    %v98 = vld [vmem:[#allocation5 + $0x18] sm:$0xf]
    %v99 = vld [vmem:[#allocation5 + $0x1c] sm:$0xf]
    %v100 = vld [vmem:[#allocation5 + $0x20] sm:$0xf]
    %v101 = vld [vmem:[#allocation5 + $0x24] sm:$0xf]
    %v102 = vld [vmem:[#allocation5 + $0x28] sm:$0xf]
    %v103 = vld [vmem:[#allocation5 + $0x2c] sm:$0xf]
    %v104 = vld [vmem:[#allocation5 + $0x30] sm:$0xf]
    %v105 = vld [vmem:[#allocation5 + $0x34] sm:$0xf]
    %v106 = vld [vmem:[#allocation5 + $0x38] sm:$0xf]
    %v107 = vld [vmem:[#allocation5 + $0x3c] sm:$0xf]
    %v108 = vld [vmem:[#allocation5 + $0x40] sm:$0xf]
    %v109 = vld [vmem:[#allocation5 + $0x44] sm:$0xf]
    %v110 = vld [vmem:[#allocation5 + $0x48] sm:$0xf]
    %v111 = vld [vmem:[#allocation5 + $0x4c] sm:$0xf]
    %v112 = vld [vmem:[#allocation5 + $0x50] sm:$0xf]
    %v113 = vld [vmem:[#allocation5 + $0x54] sm:$0xf]
    %v114 = vld [vmem:[#allocation5 + $0x58] sm:$0xf]
    %v115 = vld [vmem:[#allocation5 + $0x5c] sm:$0xf]
    %v116 = vld [vmem:[#allocation5 + $0x60] sm:$0xf]
    %v117 = vld [vmem:[#allocation5 + $0x64] sm:$0xf]
    %v118 = vld [vmem:[#allocation5 + $0x68] sm:$0xf]
    %v119 = vld [vmem:[#allocation5 + $0x6c] sm:$0xf]
    %v120 = vld [vmem:[#allocation5 + $0x70] sm:$0xf]
    %v121 = vld [vmem:[#allocation5 + $0x74] sm:$0xf]
    %v122 = vld [vmem:[#allocation5 + $0x78] sm:$0xf]
    %v123 = vld [vmem:[#allocation5 + $0x7c] sm:$0xf]
    %v124 = vld [vmem:[%s2] sm:$0x1]
    %v126 = vperm.slane %v124, 0
    %v160 = vunpack.c.l.b16 %v92
    %v161 = vunpack.c.l.b16 %v93
    %v162 = vunpack.c.l.b16 %v94
    %v163 = vunpack.c.l.b16 %v95
    %v164 = vunpack.c.l.b16 %v96
    %v165 = vunpack.c.l.b16 %v97
    %v166 = vunpack.c.l.b16 %v98
    %v167 = vunpack.c.l.b16 %v99
    %v168 = vunpack.c.l.b16 %v100
    %v169 = vunpack.c.l.b16 %v101
    %v170 = vunpack.c.l.b16 %v102
    %v171 = vunpack.c.l.b16 %v103
    %v172 = vunpack.c.l.b16 %v104
    %v173 = vunpack.c.l.b16 %v105
    %v174 = vunpack.c.l.b16 %v106
    %v175 = vunpack.c.l.b16 %v107
    %v176 = vunpack.c.l.b16 %v108
    %v177 = vunpack.c.l.b16 %v109
    %v178 = vunpack.c.l.b16 %v110
    %v179 = vunpack.c.l.b16 %v111
    %v180 = vunpack.c.l.b16 %v112
    %v181 = vunpack.c.l.b16 %v113
    %v182 = vunpack.c.l.b16 %v114
    %v183 = vunpack.c.l.b16 %v115
    %v184 = vunpack.c.l.b16 %v116
    %v185 = vunpack.c.l.b16 %v117
    %v186 = vunpack.c.l.b16 %v118
    %v187 = vunpack.c.l.b16 %v119
    %v188 = vunpack.c.l.b16 %v120
    %v189 = vunpack.c.l.b16 %v121
    %v190 = vunpack.c.l.b16 %v122
    %v191 = vunpack.c.l.b16 %v123
    %v192 = vpack.c.b16 %v161, %v160
    %v193 = vpack.c.b16 %v163, %v162
    %v194 = vpack.c.b16 %v165, %v164
    %v195 = vpack.c.b16 %v167, %v166
    %v196 = vpack.c.b16 %v169, %v168
    %v197 = vpack.c.b16 %v171, %v170
    %v198 = vpack.c.b16 %v173, %v172
    %v199 = vpack.c.b16 %v175, %v174
    %v200 = vpack.c.b16 %v177, %v176
    %v201 = vpack.c.b16 %v179, %v178
    %v202 = vpack.c.b16 %v181, %v180
    %v203 = vpack.c.b16 %v183, %v182
    %v204 = vpack.c.b16 %v185, %v184
    %v205 = vpack.c.b16 %v187, %v186
    %v206 = vpack.c.b16 %v189, %v188
    %v207 = vpack.c.b16 %v191, %v190
    %224 = vmatpush.bf16.msra.mxu0 %v199
    %225 = vmatpush.bf16.msra.mxu0 %v198
    %226 = vmatpush.bf16.msra.mxu0 %v197
    %227 = vmatpush.bf16.msra.mxu0 %v196
    %228 = vmatpush.bf16.msra.mxu0 %v195
    %229 = vmatpush.bf16.msra.mxu0 %v194
    %230 = vmatpush.bf16.msra.mxu0 %v193
    %231 = vmatpush.bf16.msra.mxu0 %v192
    %232 = vmatmul.bf16.gmra.mxu0 %v90
    %v233 = vpop.f32.mrf.mxu0
    %v234 = vadd.f32 %v126, %v233
    %v235 = vpop.f32.mrf.mxu0
    %236 = vdwg.mxu0
    %237 = vmatpush.bf16.msra.mxu0 %v207
    %238 = vmatpush.bf16.msra.mxu0 %v206
    %239 = vmatpush.bf16.msra.mxu0 %v205
    %240 = vmatpush.bf16.msra.mxu0 %v204
    %241 = vmatpush.bf16.msra.mxu0 %v203
    %242 = vmatpush.bf16.msra.mxu0 %v202
    %243 = vmatpush.bf16.msra.mxu0 %v201
    %244 = vmatpush.bf16.msra.mxu0 %v200
    %245 = vmatmul.bf16.gmra.mxu0 %v91
    %v246 = vpop.f32.mrf.mxu0
    %v247 = vadd.f32 %v234, %v246
    %v248 = vpop.f32.mrf.mxu0
    %249 = vdwg.mxu0
    %v250 = vmax.f32 %v247, 0.0
    %v251 = vpack.c.bf16 %v250, %v250
    %v252 = vld [vmem:[#allocation7] sm:$0xf]
    %v253 = vld [vmem:[#allocation7 + $0x4] sm:$0xf]
    %v254 = vld [vmem:[#allocation7 + $0x8] sm:$0xf]
    %v255 = vld [vmem:[#allocation7 + $0xc] sm:$0xf]
    %v256 = vld [vmem:[#allocation7 + $0x10] sm:$0xf]
    %v257 = vld [vmem:[#allocation7 + $0x14] sm:$0xf]
    %v258 = vld [vmem:[#allocation7 + $0x18] sm:$0xf]
    %v259 = vld [vmem:[#allocation7 + $0x1c] sm:$0xf]
    %v260 = vld [vmem:[#allocation7 + $0x20] sm:$0xf]
    %v261 = vld [vmem:[#allocation7 + $0x24] sm:$0xf]
    %v262 = vld [vmem:[#allocation7 + $0x28] sm:$0xf]
    %v263 = vld [vmem:[#allocation7 + $0x2c] sm:$0xf]
    %v264 = vld [vmem:[#allocation7 + $0x30] sm:$0xf]
    %v265 = vld [vmem:[#allocation7 + $0x34] sm:$0xf]
    %v266 = vld [vmem:[#allocation7 + $0x38] sm:$0xf]
    %v267 = vld [vmem:[#allocation7 + $0x3c] sm:$0xf]
    %v268 = vld [vmem:[%s4] sm:$0x1]
    %v270 = vperm.slane %v268, 0
    %v288 = vunpack.c.l.b16 %v252
    %v289 = vunpack.c.l.b16 %v253
    %v290 = vunpack.c.l.b16 %v254
    %v291 = vunpack.c.l.b16 %v255
    %v292 = vunpack.c.l.b16 %v256
    %v293 = vunpack.c.l.b16 %v257
    %v294 = vunpack.c.l.b16 %v258
    %v295 = vunpack.c.l.b16 %v259
    %v296 = vunpack.c.l.b16 %v260
    %v297 = vunpack.c.l.b16 %v261
    %v298 = vunpack.c.l.b16 %v262
    %v299 = vunpack.c.l.b16 %v263
    %v300 = vunpack.c.l.b16 %v264
    %v301 = vunpack.c.l.b16 %v265
    %v302 = vunpack.c.l.b16 %v266
    %v303 = vunpack.c.l.b16 %v267
    %v304 = vpack.c.b16 %v289, %v288
    %v305 = vpack.c.b16 %v291, %v290
    %v306 = vpack.c.b16 %v293, %v292
    %v307 = vpack.c.b16 %v295, %v294
    %v308 = vpack.c.b16 %v297, %v296
    %v309 = vpack.c.b16 %v299, %v298
    %v310 = vpack.c.b16 %v301, %v300
    %v311 = vpack.c.b16 %v303, %v302
    %320 = vmatpush.bf16.msra.mxu0 %v311
    %321 = vmatpush.bf16.msra.mxu0 %v310
    %322 = vmatpush.bf16.msra.mxu0 %v309
    %323 = vmatpush.bf16.msra.mxu0 %v308
    %324 = vmatpush.bf16.msra.mxu0 %v307
    %325 = vmatpush.bf16.msra.mxu0 %v306
    %326 = vmatpush.bf16.msra.mxu0 %v305
    %327 = vmatpush.bf16.msra.mxu0 %v304
    %328 = vmatmul.bf16.gmra.mxu0 %v251
    %v329 = vpop.f32.mrf.mxu0
    %v330 = vadd.f32 %v270, %v329
    %v331 = vpop.f32.mrf.mxu0
    %332 = vdwg.mxu0
    %v333 = vmax.f32 %v330, 0.0
    %v334 = vadd.f32 %v250, %v333
    %v335 = vpack.c.bf16 %v334, %v334
    %v336 = vld [vmem:[#allocation8] sm:$0xf]
    %v337 = vld [vmem:[#allocation8 + $0x4] sm:$0xf]
    %v338 = vld [vmem:[#allocation8 + $0x8] sm:$0xf]
    %v339 = vld [vmem:[#allocation8 + $0xc] sm:$0xf]
    %v340 = vld [vmem:[#allocation8 + $0x10] sm:$0xf]
    %v341 = vld [vmem:[#allocation8 + $0x14] sm:$0xf]
    %v342 = vld [vmem:[#allocation8 + $0x18] sm:$0xf]
    %v343 = vld [vmem:[#allocation8 + $0x1c] sm:$0xf]
    %v344 = vld [vmem:[#allocation8 + $0x20] sm:$0xf]
    %v345 = vld [vmem:[#allocation8 + $0x24] sm:$0xf]
    %v346 = vld [vmem:[#allocation8 + $0x28] sm:$0xf]
    %v347 = vld [vmem:[#allocation8 + $0x2c] sm:$0xf]
    %v348 = vld [vmem:[#allocation8 + $0x30] sm:$0xf]
    %v349 = vld [vmem:[#allocation8 + $0x34] sm:$0xf]
    %v350 = vld [vmem:[#allocation8 + $0x38] sm:$0xf]
    %v351 = vld [vmem:[#allocation8 + $0x3c] sm:$0xf]
    %v352 = vld [vmem:[%s6] sm:$0x1]
    %v354 = vperm.slane %v352, 0
    %v372 = vunpack.c.l.b16 %v336
    %v373 = vunpack.c.l.b16 %v337
    %v374 = vunpack.c.l.b16 %v338
    %v375 = vunpack.c.l.b16 %v339
    %v376 = vunpack.c.l.b16 %v340
    %v377 = vunpack.c.l.b16 %v341
    %v378 = vunpack.c.l.b16 %v342
    %v379 = vunpack.c.l.b16 %v343
    %v380 = vunpack.c.l.b16 %v344
    %v381 = vunpack.c.l.b16 %v345
    %v382 = vunpack.c.l.b16 %v346
    %v383 = vunpack.c.l.b16 %v347
    %v384 = vunpack.c.l.b16 %v348
    %v385 = vunpack.c.l.b16 %v349
    %v386 = vunpack.c.l.b16 %v350
    %v387 = vunpack.c.l.b16 %v351
    %v388 = vpack.c.b16 %v373, %v372
    %v389 = vpack.c.b16 %v375, %v374
    %v390 = vpack.c.b16 %v377, %v376
    %v391 = vpack.c.b16 %v379, %v378
    %v392 = vpack.c.b16 %v381, %v380
    %v393 = vpack.c.b16 %v383, %v382
    %v394 = vpack.c.b16 %v385, %v384
    %v395 = vpack.c.b16 %v387, %v386
    %404 = vmatpush.bf16.msra.mxu0 %v395
    %405 = vmatpush.bf16.msra.mxu0 %v394
    %406 = vmatpush.bf16.msra.mxu0 %v393
    %407 = vmatpush.bf16.msra.mxu0 %v392
    %408 = vmatpush.bf16.msra.mxu0 %v391
    %409 = vmatpush.bf16.msra.mxu0 %v390
    %410 = vmatpush.bf16.msra.mxu0 %v389
    %411 = vmatpush.bf16.msra.mxu0 %v388
    %412 = vmatmul.bf16.gmra.mxu0 %v335
    %v413 = vpop.f32.mrf.mxu0
    %v414 = vadd.f32 %v354, %v413
    %v415 = vpop.f32.mrf.mxu0
    %416 = vdwg.mxu0
    %417 = vst [vmem:[#allocation10] sm:$0xff] %v414
    // Predicated region
    $region46: #{_bow_forward.1} parent=1 // pred_check
      _
    $region47: #{_bow_forward.1} parent=1 // pred_check_branch
      %419 = sbr.rel (0) target = $region49
    $region48: #{_bow_forward.1} parent=1 // pred_region
      %421 = vsyncadd [#allocation4], 0
      %s423 = sshll.u32 [#allocation10], 4
      %s424 = int_to_ptr.vmem [resolvable:$true] %s423
      %s425 = sshll.u32 %s7, 4
      %s426 = int_to_ptr.hbm [resolvable:$true] %s425
      %428 = dma.vmem_to_hbm [thread:$0]  %s424, 128, %s426, [#allocation4]
    $region49: #{_bow_forward.1} parent=1 // pred_fallthru
      _
    // Predicated region
    $region50: #{_bow_forward.1} parent=1 // pred_check
      _
    $region51: #{_bow_forward.1} parent=1 // pred_check_branch
      %430 = sbr.rel (0) target = $region53
    $region52: #{_bow_forward.1} parent=1 // pred_region
      %432 = dma.done [#allocation4], 128
    $region53: #{_bow_forward.1} parent=1 // pred_fallthru
      _
    %433 = vsyncpa [#allocation3], 1
    %434 = vsyncpa [#allocation6], 1
    %435 = vsyncpa [#allocation9], 1
    %436 = vsyncpa [#allocation4], 1

</llo_original>
